<compile_context>
chip_gen: v5e
topology: v5e:2x2
jax: 0.10.0
libtpu: 0.0.40
codegen_flags: <defaults>
</compile_context>

<pallas_src>
import functools

import jax
import jax.numpy as jnp
from jax.experimental import pallas as pl
from jax.experimental.pallas import tpu as pltpu

HIDDEN = 32       # hidden width of V_nn
TILE_N = 512      # batch tile on the lane axis (sweep 512/768/1024; >=256)


def _american_pinn_kernel(st_ref, l1_ref, w23_ref, b23_ref, l4_ref, out_ref,
                          *, hidden, compute_dtype):
    """One batch tile of the 2 -> H -> H -> H -> 1 tanh MLP.

    st_ref : (2, TILE_N)   row 0 = S, row 1 = tau (batch on lanes)
    l1_ref : (3, H, 1)     [w1 column for S, w1 column for tau, b1]
    w23_ref: (2, H, H)     [W2^T, W3^T]
    b23_ref: (2, H, 1)     [b2, b3]
    l4_ref : (1, H+1)      [w4 row | b4]
    out_ref: (1, TILE_N)
    """
    cdt = compute_dtype

    x = st_ref[...].astype(cdt)            # (2, TILE_N)
    s = x[0:1, :]                          # (1, TILE_N)
    tau = x[1:2, :]                        # (1, TILE_N)

    # Layer 1: cat(S, tau) @ W1 + b1 as a broadcast FMA on the VPU.
    h = jnp.tanh(l1_ref[0] * s + l1_ref[1] * tau + l1_ref[2])   # (H, TILE_N), cdt

    # Layers 2-3: W^T @ h on the MXU (K=H, N=TILE_N lane-full), f32 accumulate,
    # tanh in the compute dtype (bf16 on v6e/v7x -> ~2x EUP throughput).
    for layer in range(2):
        pre = (jnp.dot(w23_ref[layer], h, preferred_element_type=jnp.float32)
               + b23_ref[layer])
        h = jnp.tanh(pre.astype(cdt))

    # Output layer (linear): (1,H) @ (H,TILE_N) -> (1, TILE_N), lane-dense store.
    w4 = l4_ref[:, :hidden]                # (1, H)
    b4 = l4_ref[:, hidden:]                # (1, 1)
    out = jnp.dot(w4, h, preferred_element_type=jnp.float32) + b4
    out_ref[...] = out.astype(out_ref.dtype)


def _default_compute_dtype():
    """bf16 activations/tanh on chips with bf16 VPU/EUP (v6e / v7x); f32 otherwise."""
    try:
        kind = jax.devices()[0].device_kind.lower()
    except Exception:  # e.g. no TPU / interpret mode
        return jnp.float32
    if any(tag in kind for tag in ("v6", "v7", "tpu7", "trillium")):
        return jnp.bfloat16
    return jnp.float32


def _pick_tile(n, tile_n):
    """Shrink the batch tile (never below 256) so the grid has >= 2 steps."""
    t = int(tile_n)
    while t > 256 and pl.cdiv(n, t) < 2:
        t //= 2
    return t


def american_pinn_forward(S, tau, params, tile_n=TILE_N, compute_dtype=None):
    """V = V_nn(cat(S, tau, dim=1)) computed in a single Pallas TPU kernel.

    S, tau: (N, 1) float32; returns (N, 1) float32.
    """
    N = S.shape[0]
    assert S.shape == (N, 1) and tau.shape == (N, 1)

    if compute_dtype is None:
        compute_dtype = _default_compute_dtype()

    w1, b1, w2, b2, w3, b3, w4, b4 = params
    H = w1.shape[1]

    # Pack the 9 parameters into 4 resident arrays (transposed, batch-on-lane).
    l1 = jnp.stack([w1[0:1, :].T, w1[1:2, :].T, b1.T], axis=0).astype(compute_dtype)  # (3,H,1)
    w23 = jnp.stack([w2.T, w3.T], axis=0).astype(compute_dtype)                        # (2,H,H)
    b23 = jnp.stack([b2.T, b3.T], axis=0).astype(compute_dtype)                        # (2,H,1)
    l4 = jnp.concatenate([w4.T, b4], axis=1).astype(compute_dtype)                     # (1,H+1)

    # Tile / grid sizing (grid >= 2 so both v7x TensorCores get work when N allows).
    tile = _pick_tile(N, tile_n)
    n_pad = pl.cdiv(N, tile) * tile
    grid = (n_pad // tile,)

    # Build the (2, n_pad) input slab without an interleaving transpose:
    # (N,1)->(1,N) reshape is free in row-major, and padding is folded into the
    # single concatenate (row-major layout of (2, n_pad) is [S.., 0.., tau.., 0..]).
    s_row = S.reshape(1, N)
    t_row = tau.reshape(1, N)
    if n_pad == N:
        st = jnp.concatenate([s_row, t_row], axis=0)
    else:
        pad = jnp.zeros((1, n_pad - N), S.dtype)
        st = jnp.concatenate([s_row, pad, t_row, pad], axis=1).reshape(2, n_pad)

    def resident(arr):
        # Whole-array block with a constant index_map -> stays VMEM-resident,
        # not re-DMA'd across the batch grid.
        return pl.BlockSpec(arr.shape, lambda i: (0,) * arr.ndim)

    kernel = functools.partial(_american_pinn_kernel,
                               hidden=H, compute_dtype=compute_dtype)

    out = pl.pallas_call(
        kernel,
        out_shape=jax.ShapeDtypeStruct((1, n_pad), jnp.float32),
        grid_spec=pltpu.PrefetchScalarGridSpec(
            num_scalar_prefetch=0,
            grid=grid,
            in_specs=[
                pl.BlockSpec((2, tile), lambda i: (0, i)),   # stacked S/tau tile
                resident(l1), resident(w23), resident(b23), resident(l4),
            ],
            out_specs=pl.BlockSpec((1, tile), lambda i: (0, i)),
        ),
        compiler_params=pltpu.CompilerParams(
            dimension_semantics=("parallel",)),
    )(st, l1, w23, b23, l4)

    return out[0, :N].reshape(N, 1)


def init_vnn_params(key, hidden=HIDDEN):
    """Deterministic init of the V_nn MLP (2 -> H -> H -> H -> 1), PyTorch-Linear-style uniform."""
    ks = jax.random.split(key, 8)

    def lin(kw, kb, fan_in, fan_out):
        bound = 1.0 / jnp.sqrt(fan_in)
        w = jax.random.uniform(kw, (fan_in, fan_out), jnp.float32, -bound, bound)
        b = jax.random.uniform(kb, (1, fan_out), jnp.float32, -bound, bound)
        return w, b

    w1, b1 = lin(ks[0], ks[1], 2, hidden)
    w2, b2 = lin(ks[2], ks[3], hidden, hidden)
    w3, b3 = lin(ks[4], ks[5], hidden, hidden)
    w4, b4 = lin(ks[6], ks[7], hidden, 1)
    return (w1, b1, w2, b2, w3, b3, w4, b4)


def reference_forward(S, tau, params):
    """Plain-JAX f32 reference of the same forward (for correctness check)."""
    w1, b1, w2, b2, w3, b3, w4, b4 = params
    x = jnp.concatenate((S, tau), axis=1)
    h = jnp.tanh(x @ w1 + b1)
    h = jnp.tanh(h @ w2 + b2)
    h = jnp.tanh(h @ w3 + b3)
    return h @ w4 + b4


if __name__ == "__main__":
    key = jax.random.PRNGKey(0)
    k_params, k_s, k_tau = jax.random.split(key, 3)

    # Option-pricing buffers (registered on the module, unused in forward).
    K, T, r, sigma, S_inf = 100.0, 1.0, 0.05, 0.2, 1e8  # noqa: F841

    N = 1024  # two TILE_N=512 tiles -> grid of 2 (both TCs get work on v7x)
    S = jax.random.uniform(k_s, (N, 1), jnp.float32, 0.0, 200.0)
    tau = jax.random.uniform(k_tau, (N, 1), jnp.float32, 0.0, T)

    params = init_vnn_params(k_params)
    cdt = _default_compute_dtype()

    V = american_pinn_forward(S, tau, params, compute_dtype=cdt)
    V = jax.block_until_ready(V)

    V_ref = reference_forward(S, tau, params)
    assert V.shape == (N, 1)

    if cdt == jnp.float32:
        rtol, atol = 1e-5, 1e-5
    else:  # bf16 activation/tanh path on v6e/v7x (f32 accumulation on every dot)
        rtol, atol = 2e-2, 2e-2
    assert jnp.allclose(V, V_ref, rtol=rtol, atol=atol), "mismatch vs reference"

    print("KERNEL_OK")
</pallas_src>

<mosaic_0001>
module attributes {stable_mosaic.version = 11 : i64} {
  func.func @_american_pinn_kernel(%arg0: i32, %arg1: memref<2x512xf32, #tpu.memory_space<vmem>>, %arg2: memref<3x32x1xf32, #tpu.memory_space<vmem>>, %arg3: memref<2x32x32xf32, #tpu.memory_space<vmem>>, %arg4: memref<2x32x1xf32, #tpu.memory_space<vmem>>, %arg5: memref<1x33xf32, #tpu.memory_space<vmem>>, %arg6: memref<1x512xf32, #tpu.memory_space<vmem>>) attributes {dimension_semantics = [#tpu.dimension_semantics<parallel>], iteration_bounds = array<i64: 2>, scalar_prefetch = 0 : i64, scratch_operands = 0 : i64, tpu.core_type = #tpu.core_type<tc>, window_params = [{transform_indices = @transform_0, window_bounds = array<i64: 2, 512>}, {pipeline_mode = #tpu.pipeline_mode<synchronous>, transform_indices = @transform_1, window_bounds = array<i64: 3, 32, 1>}, {pipeline_mode = #tpu.pipeline_mode<synchronous>, transform_indices = @transform_2, window_bounds = array<i64: 2, 32, 32>}, {pipeline_mode = #tpu.pipeline_mode<synchronous>, transform_indices = @transform_3, window_bounds = array<i64: 2, 32, 1>}, {pipeline_mode = #tpu.pipeline_mode<synchronous>, transform_indices = @transform_4, window_bounds = array<i64: 1, 33>}, {transform_indices = @transform_5, window_bounds = array<i64: 1, 512>}]} {
    %c0 = arith.constant 0 : index
    %c0_0 = arith.constant 0 : index
    %0 = vector.load %arg1[%c0, %c0_0] : memref<2x512xf32, #tpu.memory_space<vmem>>, vector<2x512xf32>
    %1 = vector.extract_strided_slice %0 {offsets = [0, 0], sizes = [1, 512], strides = [1, 1]} : vector<2x512xf32> to vector<1x512xf32>
    %2 = vector.extract_strided_slice %0 {offsets = [1, 0], sizes = [1, 512], strides = [1, 1]} : vector<2x512xf32> to vector<1x512xf32>
    %c0_1 = arith.constant 0 : index
    %c0_2 = arith.constant 0 : index
    %c0_3 = arith.constant 0 : index
    %3 = vector.load %arg2[%c0_1, %c0_2, %c0_3] : memref<3x32x1xf32, #tpu.memory_space<vmem>>, vector<1x32x1xf32>
    %4 = vector.shape_cast %3 : vector<1x32x1xf32> to vector<32x1xf32>
    %5 = vector.broadcast %4 : vector<32x1xf32> to vector<32x512xf32>
    %6 = vector.broadcast %1 : vector<1x512xf32> to vector<32x512xf32>
    %7 = arith.mulf %5, %6 : vector<32x512xf32>
    %c1 = arith.constant 1 : index
    %c0_4 = arith.constant 0 : index
    %c0_5 = arith.constant 0 : index
    %8 = vector.load %arg2[%c1, %c0_4, %c0_5] : memref<3x32x1xf32, #tpu.memory_space<vmem>>, vector<1x32x1xf32>
    %9 = vector.shape_cast %8 : vector<1x32x1xf32> to vector<32x1xf32>
    %10 = vector.broadcast %9 : vector<32x1xf32> to vector<32x512xf32>
    %11 = vector.broadcast %2 : vector<1x512xf32> to vector<32x512xf32>
    %12 = arith.mulf %10, %11 : vector<32x512xf32>
    %13 = arith.addf %7, %12 : vector<32x512xf32>
    %c2 = arith.constant 2 : index
    %c0_6 = arith.constant 0 : index
    %c0_7 = arith.constant 0 : index
    %14 = vector.load %arg2[%c2, %c0_6, %c0_7] : memref<3x32x1xf32, #tpu.memory_space<vmem>>, vector<1x32x1xf32>
    %15 = vector.shape_cast %14 : vector<1x32x1xf32> to vector<32x1xf32>
    %16 = vector.broadcast %15 : vector<32x1xf32> to vector<32x512xf32>
    %17 = arith.addf %13, %16 : vector<32x512xf32>
    %18 = math.tanh %17 : vector<32x512xf32>
    %c0_8 = arith.constant 0 : index
    %c0_9 = arith.constant 0 : index
    %c0_10 = arith.constant 0 : index
    %19 = vector.load %arg3[%c0_8, %c0_9, %c0_10] : memref<2x32x32xf32, #tpu.memory_space<vmem>>, vector<1x32x32xf32>
    %20 = vector.shape_cast %19 : vector<1x32x32xf32> to vector<32x32xf32>
    %cst = arith.constant dense<0.000000e+00> : vector<32x512xf32>
    %21 = tpu.matmul %20, %18, %cst {dimension_numbers = #tpu.dot_dimension_numbers<[1], [0], [0], [1], [0, 0, 1, 1], [], []>} : vector<32x32xf32>, vector<32x512xf32>, vector<32x512xf32> -> vector<32x512xf32>
    %c0_11 = arith.constant 0 : index
    %c0_12 = arith.constant 0 : index
    %c0_13 = arith.constant 0 : index
    %22 = vector.load %arg4[%c0_11, %c0_12, %c0_13] : memref<2x32x1xf32, #tpu.memory_space<vmem>>, vector<1x32x1xf32>
    %23 = vector.shape_cast %22 : vector<1x32x1xf32> to vector<32x1xf32>
    %24 = vector.broadcast %23 : vector<32x1xf32> to vector<32x512xf32>
    %25 = arith.addf %21, %24 : vector<32x512xf32>
    %26 = math.tanh %25 : vector<32x512xf32>
    %c1_14 = arith.constant 1 : index
    %c0_15 = arith.constant 0 : index
    %c0_16 = arith.constant 0 : index
    %27 = vector.load %arg3[%c1_14, %c0_15, %c0_16] : memref<2x32x32xf32, #tpu.memory_space<vmem>>, vector<1x32x32xf32>
    %28 = vector.shape_cast %27 : vector<1x32x32xf32> to vector<32x32xf32>
    %cst_17 = arith.constant dense<0.000000e+00> : vector<32x512xf32>
    %29 = tpu.matmul %28, %26, %cst_17 {dimension_numbers = #tpu.dot_dimension_numbers<[1], [0], [0], [1], [0, 0, 1, 1], [], []>} : vector<32x32xf32>, vector<32x512xf32>, vector<32x512xf32> -> vector<32x512xf32>
    %c1_18 = arith.constant 1 : index
    %c0_19 = arith.constant 0 : index
    %c0_20 = arith.constant 0 : index
    %30 = vector.load %arg4[%c1_18, %c0_19, %c0_20] : memref<2x32x1xf32, #tpu.memory_space<vmem>>, vector<1x32x1xf32>
    %31 = vector.shape_cast %30 : vector<1x32x1xf32> to vector<32x1xf32>
    %32 = vector.broadcast %31 : vector<32x1xf32> to vector<32x512xf32>
    %33 = arith.addf %29, %32 : vector<32x512xf32>
    %34 = math.tanh %33 : vector<32x512xf32>
    %c0_21 = arith.constant 0 : index
    %c0_22 = arith.constant 0 : index
    %35 = vector.load %arg5[%c0_21, %c0_22] : memref<1x33xf32, #tpu.memory_space<vmem>>, vector<1x32xf32>
    %c0_23 = arith.constant 0 : index
    %c32 = arith.constant 32 : index
    %36 = vector.load %arg5[%c0_23, %c32] : memref<1x33xf32, #tpu.memory_space<vmem>>, vector<1x1xf32>
    %cst_24 = arith.constant dense<0.000000e+00> : vector<1x512xf32>
    %37 = tpu.matmul %35, %34, %cst_24 {dimension_numbers = #tpu.dot_dimension_numbers<[1], [0], [0], [1], [0, 0, 1, 1], [], []>} : vector<1x32xf32>, vector<32x512xf32>, vector<1x512xf32> -> vector<1x512xf32>
    %38 = vector.broadcast %36 : vector<1x1xf32> to vector<1x512xf32>
    %39 = arith.addf %37, %38 : vector<1x512xf32>
    %c0_25 = arith.constant 0 : index
    %c0_26 = arith.constant 0 : index
    %40 = vector.load %arg6[%c0_25, %c0_26] : memref<1x512xf32, #tpu.memory_space<vmem>>, vector<1x512xf32>
    tpu.vector_store %arg6[%c0_25, %c0_26], %39 {strides = array<i32>} : memref<1x512xf32, #tpu.memory_space<vmem>>, vector<1x512xf32>,
    return
  }
  func.func @transform_0(%arg0: i32) -> (i32, i32) {
    %c0_i32 = arith.constant 0 : i32
    %c0_i32_0 = arith.constant 0 : i32
    return %c0_i32, %arg0 : i32, i32
  }
  func.func @transform_1(%arg0: i32) -> (i32, i32, i32) {
    %c0_i32 = arith.constant 0 : i32
    %c0_i32_0 = arith.constant 0 : i32
    %c0_i32_1 = arith.constant 0 : i32
    %c0_i32_2 = arith.constant 0 : i32
    return %c0_i32, %c0_i32_0, %c0_i32_1 : i32, i32, i32
  }
  func.func @transform_2(%arg0: i32) -> (i32, i32, i32) {
    %c0_i32 = arith.constant 0 : i32
    %c0_i32_0 = arith.constant 0 : i32
    %c0_i32_1 = arith.constant 0 : i32
    %c0_i32_2 = arith.constant 0 : i32
    return %c0_i32, %c0_i32_0, %c0_i32_1 : i32, i32, i32
  }
  func.func @transform_3(%arg0: i32) -> (i32, i32, i32) {
    %c0_i32 = arith.constant 0 : i32
    %c0_i32_0 = arith.constant 0 : i32
    %c0_i32_1 = arith.constant 0 : i32
    %c0_i32_2 = arith.constant 0 : i32
    return %c0_i32, %c0_i32_0, %c0_i32_1 : i32, i32, i32
  }
  func.func @transform_4(%arg0: i32) -> (i32, i32) {
    %c0_i32 = arith.constant 0 : i32
    %c0_i32_0 = arith.constant 0 : i32
    %c0_i32_1 = arith.constant 0 : i32
    return %c0_i32, %c0_i32_0 : i32, i32
  }
  func.func @transform_5(%arg0: i32) -> (i32, i32) {
    %c0_i32 = arith.constant 0 : i32
    %c0_i32_0 = arith.constant 0 : i32
    return %c0_i32, %arg0 : i32, i32
  }
}

</mosaic_0001>

<llo_original>
// kernel: tpu_custom_call.1
$region0: #{tpu_custom_call.1}
  #allocation0 [shape = 'u32[]', space=smem, size = 0x4, offset = 0x4, fixed_abs, tag = 'smem constant byte address 0x4 - core index']
  #allocation1 [shape = 'u32[72,128]{1,0:T(1,128)}', space=vmem, size = 0x9000, scoped, tag = 'internal scratch']
  %s0 = inlined_call_operand.vmem [shape: f32[2,1024], index: 0, kind: input, shape index: {}]
  %s1 = inlined_call_operand.vmem [shape: f32[3,32,1], index: 1, kind: input, shape index: {}]
  %s2 = inlined_call_operand.vmem [shape: f32[2,32,32], index: 2, kind: input, shape index: {}]
  %s3 = inlined_call_operand.vmem [shape: f32[2,32,1], index: 3, kind: input, shape index: {}]
  %s4 = inlined_call_operand.vmem [shape: f32[1,33], index: 4, kind: input, shape index: {}]
  %s5 = inlined_call_operand.hbm [shape: f32[1,1024], index: 5, kind: output, shape index: {}]
  %s6 = sld [smem:[#allocation0]]
  $region53: #{tpu_custom_call.1} parent=0
    _
  %s8 = ssub.s32 1, %s6
  %s9 = scalar_select 0, %s8, %s6
  $region1: #{tpu_custom_call.1} parent=0
    #allocation2 [shape = 'u8[4096]{0}', space=vmem, size = 0x1000, scoped, tag = 'output window, operand 0']
    #allocation3 [shape = 's32[2]{0}', space=sflag, size = 0x8, scoped, tag = 'scoped memory for tpu_custom_call.1']
    %10 = vsyncpa [#allocation3], 0
    %s11 = scalar_lea.sflag [#allocation3], 1
    %12 = vsyncpa %s11, 0
    loop: start=0, step=1, limit=4
    $region2: #{tpu_custom_call.1} parent=1 // loop_pre_header
      _
    $region3: #{tpu_custom_call.1} parent=1 // loop_header
      %s14 = sphi 0, %s18
      %p15 = scmp.ge.s32.totalorder %s14, 4
      %s24 = sphi 0, %s26
      %s27 = sphi 0, %s24
      %s28 = sphi 0, %s27
      %s44 = sphi 0, %s28
      %s48 = sphi 0, %s48
      %s50 = sphi 0, %s48
      %s51 = sphi 0, %s50
      %s65 = sphi 0, %s51
      %s69 = sphi 0, %s69
      %s71 = sphi 0, %s69
      %s72 = sphi 0, %s71
      %s86 = sphi 0, %s72
      %s90 = sphi 0, %s90
      %s92 = sphi 0, %s90
      %s93 = sphi 0, %s92
      %s107 = sphi 0, %s93
      %s111 = sphi 0, %s111
      %s113 = sphi 0, %s111
      %s114 = sphi 0, %s113
      %s128 = sphi 0, %s114
      %s134 = sphi 0, %s136
      %s137 = sphi 0, %s134
      %s138 = sphi 0, %s137
      %s154 = sphi 0, %s138
    $region4: #{tpu_custom_call.1} parent=1 // loop_header_branch
      %17 = sbr.rel (%p15) target = $region8
    $region5: #{tpu_custom_call.1} parent=1 // loop_body
      %s19 = ssub.s32 %s14, 1
      %s20 = ssub.s32 %s14, 2
      %s21 = sadd.s32 %s14, 1
      %s22 = ssub.s32 %s14, %s21
      %p23 = scmp.eq.s32.totalorder %s22, 0
      %s25 = sadd.s32 %s24, 1
      %s26 = scalar_select %p23, %s24, %s25
      %p29 = pneg %p23
      %p30 = scmp.eq.s32.totalorder %s14, 1
      %p31 = por %p29, %p30
      %p32 = scmp.ne.s32.totalorder %s24, %s27
      %p33 = scmp.eq.s32.totalorder %s14, 0
      %p34 = por %p32, %p33
      %p35 = scmp.ne.s32.totalorder %s24, %s27
      %p36 = scmp.eq.s32.totalorder %s19, 1
      %p37 = por %p35, %p36
      %p38 = scmp.ne.s32.totalorder %s27, %s28
      %p39 = scmp.eq.s32.totalorder %s19, 0
      %p40 = por %p38, %p39
      %p41 = scmp.ne.s32.totalorder %s27, %s28
      %p42 = scmp.eq.s32.totalorder %s20, 1
      %p43 = por %p41, %p42
      %p45 = scmp.ne.s32.totalorder %s28, %s44
      %p46 = scmp.eq.s32.totalorder %s20, 0
      %p47 = por %p45, %p46
      %s49 = sadd.s32 %s48, 1
      %p52 = scmp.eq.s32.totalorder %s14, 1
      %p53 = scmp.ne.s32.totalorder %s48, %s50
      %p54 = scmp.eq.s32.totalorder %s14, 0
      %p55 = por %p53, %p54
      %p56 = scmp.ne.s32.totalorder %s48, %s50
      %p57 = scmp.eq.s32.totalorder %s19, 1
      %p58 = por %p56, %p57
      %p59 = scmp.ne.s32.totalorder %s50, %s51
      %p60 = scmp.eq.s32.totalorder %s19, 0
      %p61 = por %p59, %p60
      %p62 = scmp.ne.s32.totalorder %s50, %s51
      %p63 = scmp.eq.s32.totalorder %s20, 1
      %p64 = por %p62, %p63
      %p66 = scmp.ne.s32.totalorder %s51, %s65
      %p67 = scmp.eq.s32.totalorder %s20, 0
      %p68 = por %p66, %p67
      %s70 = sadd.s32 %s69, 1
      %p73 = scmp.eq.s32.totalorder %s14, 1
      %p74 = scmp.ne.s32.totalorder %s69, %s71
      %p75 = scmp.eq.s32.totalorder %s14, 0
      %p76 = por %p74, %p75
      %p77 = scmp.ne.s32.totalorder %s69, %s71
      %p78 = scmp.eq.s32.totalorder %s19, 1
      %p79 = por %p77, %p78
      %p80 = scmp.ne.s32.totalorder %s71, %s72
      %p81 = scmp.eq.s32.totalorder %s19, 0
      %p82 = por %p80, %p81
      %p83 = scmp.ne.s32.totalorder %s71, %s72
      %p84 = scmp.eq.s32.totalorder %s20, 1
      %p85 = por %p83, %p84
      %p87 = scmp.ne.s32.totalorder %s72, %s86
      %p88 = scmp.eq.s32.totalorder %s20, 0
      %p89 = por %p87, %p88
      %s91 = sadd.s32 %s90, 1
      %p94 = scmp.eq.s32.totalorder %s14, 1
      %p95 = scmp.ne.s32.totalorder %s90, %s92
      %p96 = scmp.eq.s32.totalorder %s14, 0
      %p97 = por %p95, %p96
      %p98 = scmp.ne.s32.totalorder %s90, %s92
      %p99 = scmp.eq.s32.totalorder %s19, 1
      %p100 = por %p98, %p99
      %p101 = scmp.ne.s32.totalorder %s92, %s93
      %p102 = scmp.eq.s32.totalorder %s19, 0
      %p103 = por %p101, %p102
      %p104 = scmp.ne.s32.totalorder %s92, %s93
      %p105 = scmp.eq.s32.totalorder %s20, 1
      %p106 = por %p104, %p105
      %p108 = scmp.ne.s32.totalorder %s93, %s107
      %p109 = scmp.eq.s32.totalorder %s20, 0
      %p110 = por %p108, %p109
      %s112 = sadd.s32 %s111, 1
      %p115 = scmp.eq.s32.totalorder %s14, 1
      %p116 = scmp.ne.s32.totalorder %s111, %s113
      %p117 = scmp.eq.s32.totalorder %s14, 0
      %p118 = por %p116, %p117
      %p119 = scmp.ne.s32.totalorder %s111, %s113
      %p120 = scmp.eq.s32.totalorder %s19, 1
      %p121 = por %p119, %p120
      %p122 = scmp.ne.s32.totalorder %s113, %s114
      %p123 = scmp.eq.s32.totalorder %s19, 0
      %p124 = por %p122, %p123
      %p125 = scmp.ne.s32.totalorder %s113, %s114
      %p126 = scmp.eq.s32.totalorder %s20, 1
      %p127 = por %p125, %p126
      %p129 = scmp.ne.s32.totalorder %s114, %s128
      %p130 = scmp.eq.s32.totalorder %s20, 0
      %p131 = por %p129, %p130
      %s132 = ssub.s32 %s14, %s21
      %p133 = scmp.eq.s32.totalorder %s132, 0
      %s135 = sadd.s32 %s134, 1
      %s136 = scalar_select %p133, %s134, %s135
      %p139 = pneg %p133
      %p140 = scmp.eq.s32.totalorder %s14, 1
      %p141 = por %p139, %p140
      %p142 = scmp.ne.s32.totalorder %s134, %s137
      %p143 = scmp.eq.s32.totalorder %s14, 0
      %p144 = por %p142, %p143
      %p145 = scmp.ne.s32.totalorder %s134, %s137
      %p146 = scmp.eq.s32.totalorder %s19, 1
      %p147 = por %p145, %p146
      %p148 = scmp.ne.s32.totalorder %s137, %s138
      %p149 = scmp.eq.s32.totalorder %s19, 0
      %p150 = por %p148, %p149
      %p151 = scmp.ne.s32.totalorder %s137, %s138
      %p152 = scmp.eq.s32.totalorder %s20, 1
      %p153 = por %p151, %p152
      %p155 = scmp.ne.s32.totalorder %s138, %s154
      %p156 = scmp.eq.s32.totalorder %s20, 0
      %p157 = por %p155, %p156
      %p158 = scmp.le.s32.totalorder 1, %s14
      %p159 = scmp.lt.s32.totalorder %s14, 3
      %p160 = pnand %p158, %p159
      %p161 = pneg %p160
      // Predicated region
      $region9: #{tpu_custom_call.1} parent=5 // pred_check
        _
      $region10: #{tpu_custom_call.1} parent=5 // pred_check_branch
        %163 = sbr.rel (%p160) target = $region12
      $region11: #{tpu_custom_call.1} parent=5 // pred_region
        %s164 = ssub.s32 %s14, 1
        // Predicated region
        $region13: #{tpu_custom_call.1} parent=11 // pred_check
          %p165 = pneg %p61
        $region14: #{tpu_custom_call.1} parent=11 // pred_check_branch
          %167 = sbr.rel (%p165) target = $region16
        $region15: #{tpu_custom_call.1} parent=11 // pred_region
          _
        $region16: #{tpu_custom_call.1} parent=11 // pred_fallthru
          _
        // Predicated region
        $region17: #{tpu_custom_call.1} parent=11 // pred_check
          %p168 = pneg %p82
        $region18: #{tpu_custom_call.1} parent=11 // pred_check_branch
          %170 = sbr.rel (%p168) target = $region20
        $region19: #{tpu_custom_call.1} parent=11 // pred_region
          _
        $region20: #{tpu_custom_call.1} parent=11 // pred_fallthru
          _
        // Predicated region
        $region21: #{tpu_custom_call.1} parent=11 // pred_check
          %p171 = pneg %p103
        $region22: #{tpu_custom_call.1} parent=11 // pred_check_branch
          %173 = sbr.rel (%p171) target = $region24
        $region23: #{tpu_custom_call.1} parent=11 // pred_region
          _
        $region24: #{tpu_custom_call.1} parent=11 // pred_fallthru
          _
        // Predicated region
        $region25: #{tpu_custom_call.1} parent=11 // pred_check
          %p174 = pneg %p124
        $region26: #{tpu_custom_call.1} parent=11 // pred_check_branch
          %176 = sbr.rel (%p174) target = $region28
        $region27: #{tpu_custom_call.1} parent=11 // pred_region
          _
        $region28: #{tpu_custom_call.1} parent=11 // pred_fallthru
          _
      $region12: #{tpu_custom_call.1} parent=5 // pred_fallthru
        _
      %p177 = scmp.lt.s32.totalorder %s14, 2
      // Predicated region
      $region29: #{tpu_custom_call.1} parent=5 // pred_check
        %p178 = pneg %p177
      $region30: #{tpu_custom_call.1} parent=5 // pred_check_branch
        %180 = sbr.rel (%p178) target = $region32
      $region31: #{tpu_custom_call.1} parent=5 // pred_region
        // Predicated region
        $region33: #{tpu_custom_call.1} parent=31 // pred_check
          %p181 = pneg %p34
        $region34: #{tpu_custom_call.1} parent=31 // pred_check_branch
          %183 = sbr.rel (%p181) target = $region36
        $region35: #{tpu_custom_call.1} parent=31 // pred_region
          %s184 = smul.u32 4, %s14
          %p185 = scmp.lt.s32.totalorder %s184, 7
          %s186 = scalar_select %p185, %s184, 7
          %s187 = smul.addr %s186, 2
          %s188 = scalar_lea.vmem %s0, %s187
          %s189 = smul.u32 4, %s14
        $region36: #{tpu_custom_call.1} parent=31 // pred_fallthru
          _
      $region32: #{tpu_custom_call.1} parent=5 // pred_fallthru
        _
      %p190 = scmp.le.s32.totalorder 1, %s14
      %p191 = scmp.lt.s32.totalorder %s14, 3
      %p192 = pnand %p190, %p191
      %p193 = pneg %p192
      // Predicated region
      $region37: #{tpu_custom_call.1} parent=5 // pred_check
        _
      $region38: #{tpu_custom_call.1} parent=5 // pred_check_branch
        %195 = sbr.rel (%p192) target = $region40
      $region39: #{tpu_custom_call.1} parent=5 // pred_region
        %s196 = ssub.s32 %s14, 1
        %s197 = smul.u32 4, %s19
        %p198 = scmp.lt.s32.totalorder %s197, 7
        %s199 = scalar_select %p198, %s197, 7
        %s200 = smul.addr %s199, 2
        %s201 = scalar_lea.vmem %s0, %s200
        %p202 = pneg %p40
        %p203 = pneg %p37
        %p204 = pneg %p61
        %p205 = pneg %p58
        %p206 = pneg %p82
        %p207 = pneg %p79
        %p208 = pneg %p103
        %p209 = pneg %p100
        %p210 = pneg %p124
        %p211 = pneg %p121
        %p212 = pneg %p150
        %p213 = pneg %p147
        %s214 = sand.u32 %s137, 1
        %s215 = scalar_lea.sflag [#allocation3], %s214
        %s216 = sand.u32 %s137, 1
        %s217 = smul.addr %s216, 4
        %s218 = scalar_lea.vmem [#allocation2], %s217
        %s219 = smul.u32 4, %s19
        %p220 = scmp.lt.s32.totalorder %s219, 7
        %s221 = scalar_select %p220, %s219, 7
        %s222 = smul.addr %s221, 2
        %s223 = scalar_lea.vmem %s0, %s222
        %s224 = smul.u32 4, %s19
        %s225 = smul.u32 4, %s19
        %v226 = vld [vmem:[%s223] sm:$0xff]
        %v227 = vld [vmem:[%s1] sm:$0xff]
        %v228 = vld [vmem:[%s1 + $0x8] sm:$0xff]
        %v229 = vld [vmem:[%s1 + $0x10] sm:$0xff]
        %v230 = vld [vmem:[%s1 + $0x18] sm:$0xff]
        %232 = vset.pattern.permute.xlu0 0
        %233 = vperm.xlu0 %232, %v227
        %v234 = vpop.permute.xlu0 %233
        %237 = vset.pattern.permute.xlu0 0
        %238 = vperm.xlu0 %237, %v228
        %v239 = vpop.permute.xlu0 %238
        %242 = vset.pattern.permute.xlu0 0
        %243 = vperm.xlu0 %242, %v229
        %v244 = vpop.permute.xlu0 %243
        %247 = vset.pattern.permute.xlu0 0
        %248 = vperm.xlu0 %247, %v230
        %v249 = vpop.permute.xlu0 %248
        %v252 = vperm.slane %v226, 0
        %v253 = vperm.slane %v226, 2
        %v254 = vperm.slane %v226, 4
        %v255 = vperm.slane %v226, 6
        %v260 = vperm.slane %v252, 0
        %v261 = vperm.slane %v253, 0
        %v262 = vperm.slane %v254, 0
        %v263 = vperm.slane %v255, 0
        %v264 = vmul.f32 %v234, %v260
        %v265 = vmul.f32 %v234, %v261
        %v266 = vmul.f32 %v234, %v262
        %v267 = vmul.f32 %v234, %v263
        %v268 = vmul.f32 %v239, %v260
        %v269 = vmul.f32 %v239, %v261
        %v270 = vmul.f32 %v239, %v262
        %v271 = vmul.f32 %v239, %v263
        %v272 = vmul.f32 %v244, %v260
        %v273 = vmul.f32 %v244, %v261
        %v274 = vmul.f32 %v244, %v262
        %v275 = vmul.f32 %v244, %v263
        %v276 = vmul.f32 %v249, %v260
        %v277 = vmul.f32 %v249, %v261
        %v278 = vmul.f32 %v249, %v262
        %v279 = vmul.f32 %v249, %v263
        %s280 = scalar_lea.vmem %s1, 32
        %v281 = vld [vmem:[%s280] sm:$0xff]
        %v282 = vld [vmem:[%s280 + $0x8] sm:$0xff]
        %v283 = vld [vmem:[%s280 + $0x10] sm:$0xff]
        %v284 = vld [vmem:[%s280 + $0x18] sm:$0xff]
        %286 = vset.pattern.permute.xlu0 0
        %287 = vperm.xlu0 %286, %v281
        %v288 = vpop.permute.xlu0 %287
        %291 = vset.pattern.permute.xlu0 0
        %292 = vperm.xlu0 %291, %v282
        %v293 = vpop.permute.xlu0 %292
        %296 = vset.pattern.permute.xlu0 0
        %297 = vperm.xlu0 %296, %v283
        %v298 = vpop.permute.xlu0 %297
        %301 = vset.pattern.permute.xlu0 0
        %302 = vperm.xlu0 %301, %v284
        %v303 = vpop.permute.xlu0 %302
        %v305 = vperm.slane %v226, 1
        %v306 = vperm.slane %v226, 3
        %v307 = vperm.slane %v226, 5
        %v308 = vperm.slane %v226, 7
        %v313 = vperm.slane %v305, 1
        %v314 = vperm.slane %v306, 1
        %v315 = vperm.slane %v307, 1
        %v316 = vperm.slane %v308, 1
        %v317 = vmul.f32 %v288, %v313
        %v318 = vmul.f32 %v288, %v314
        %v319 = vmul.f32 %v288, %v315
        %v320 = vmul.f32 %v288, %v316
        %v321 = vmul.f32 %v293, %v313
        %v322 = vmul.f32 %v293, %v314
        %v323 = vmul.f32 %v293, %v315
        %v324 = vmul.f32 %v293, %v316
        %v325 = vmul.f32 %v298, %v313
        %v326 = vmul.f32 %v298, %v314
        %v327 = vmul.f32 %v298, %v315
        %v328 = vmul.f32 %v298, %v316
        %v329 = vmul.f32 %v303, %v313
        %v330 = vmul.f32 %v303, %v314
        %v331 = vmul.f32 %v303, %v315
        %v332 = vmul.f32 %v303, %v316
        %v333 = vadd.f32 %v264, %v317
        %v334 = vadd.f32 %v265, %v318
        %v335 = vadd.f32 %v266, %v319
        %v336 = vadd.f32 %v267, %v320
        %v337 = vadd.f32 %v268, %v321
        %v338 = vadd.f32 %v269, %v322
        %v339 = vadd.f32 %v270, %v323
        %v340 = vadd.f32 %v271, %v324
        %v341 = vadd.f32 %v272, %v325
        %v342 = vadd.f32 %v273, %v326
        %v343 = vadd.f32 %v274, %v327
        %v344 = vadd.f32 %v275, %v328
        %v345 = vadd.f32 %v276, %v329
        %v346 = vadd.f32 %v277, %v330
        %v347 = vadd.f32 %v278, %v331
        %v348 = vadd.f32 %v279, %v332
        %s349 = scalar_lea.vmem %s1, 64
        %v350 = vld [vmem:[%s349] sm:$0xff]
        %v351 = vld [vmem:[%s349 + $0x8] sm:$0xff]
        %v352 = vld [vmem:[%s349 + $0x10] sm:$0xff]
        %v353 = vld [vmem:[%s349 + $0x18] sm:$0xff]
        %355 = vset.pattern.permute.xlu0 0
        %356 = vperm.xlu0 %355, %v350
        %v357 = vpop.permute.xlu0 %356
        %360 = vset.pattern.permute.xlu0 0
        %361 = vperm.xlu0 %360, %v351
        %v362 = vpop.permute.xlu0 %361
        %365 = vset.pattern.permute.xlu0 0
        %366 = vperm.xlu0 %365, %v352
        %v367 = vpop.permute.xlu0 %366
        %370 = vset.pattern.permute.xlu0 0
        %371 = vperm.xlu0 %370, %v353
        %v372 = vpop.permute.xlu0 %371
        %v374 = vadd.f32 %v333, %v357
        %v375 = vadd.f32 %v334, %v357
        %v376 = vadd.f32 %v335, %v357
        %v377 = vadd.f32 %v336, %v357
        %v378 = vadd.f32 %v337, %v362
        %v379 = vadd.f32 %v338, %v362
        %v380 = vadd.f32 %v339, %v362
        %v381 = vadd.f32 %v340, %v362
        %v382 = vadd.f32 %v341, %v367
        %v383 = vadd.f32 %v342, %v367
        %v384 = vadd.f32 %v343, %v367
        %v385 = vadd.f32 %v344, %v367
        %v386 = vadd.f32 %v345, %v372
        %v387 = vadd.f32 %v346, %v372
        %v388 = vadd.f32 %v347, %v372
        %v389 = vadd.f32 %v348, %v372
        %v390 = vtanh.pop %v374
        %v391 = vtanh.pop %v375
        %v392 = vtanh.pop %v376
        %v393 = vtanh.pop %v377
        %v394 = vtanh.pop %v378
        %v395 = vtanh.pop %v379
        %v396 = vtanh.pop %v380
        %v397 = vtanh.pop %v381
        %v398 = vtanh.pop %v382
        %v399 = vtanh.pop %v383
        %v400 = vtanh.pop %v384
        %v401 = vtanh.pop %v385
        %v402 = vtanh.pop %v386
        %v403 = vtanh.pop %v387
        %v404 = vtanh.pop %v388
        %v405 = vtanh.pop %v389
        %v406 = vld [vmem:[%s2] sm:$0xff]
        %v407 = vld [vmem:[%s2 + $0x8] sm:$0xff]
        %v408 = vld [vmem:[%s2 + $0x10] sm:$0xff]
        %v409 = vld [vmem:[%s2 + $0x18] sm:$0xff]
        %v410 = vld [vmem:[%s3] sm:$0xff]
        %v411 = vld [vmem:[%s3 + $0x8] sm:$0xff]
        %v412 = vld [vmem:[%s3 + $0x10] sm:$0xff]
        %v413 = vld [vmem:[%s3 + $0x18] sm:$0xff]
        %415 = vset.pattern.permute.xlu0 0
        %416 = vperm.xlu0 %415, %v410
        %v417 = vpop.permute.xlu0 %416
        %420 = vset.pattern.permute.xlu0 0
        %421 = vperm.xlu0 %420, %v411
        %v422 = vpop.permute.xlu0 %421
        %425 = vset.pattern.permute.xlu0 0
        %426 = vperm.xlu0 %425, %v412
        %v427 = vpop.permute.xlu0 %426
        %430 = vset.pattern.permute.xlu0 0
        %431 = vperm.xlu0 %430, %v413
        %v432 = vpop.permute.xlu0 %431
        %vm434 = vcmask 261120
        %v436 = vsel %vm434, %v406, 0
        %v439 = vsel %vm434, %v407, 0
        %v442 = vsel %vm434, %v408, 0
        %v445 = vsel %vm434, %v409, 0
        %447 = vmatpush.msra.mxu0 0.0
        %448 = vmatpush.msra.mxu0 0.0
        %449 = vmatpush.msra.mxu0 0.0
        %450 = vmatpush.msra.mxu0 0.0
        %451 = vmatpush.msra.mxu0 0.0
        %452 = vmatpush.msra.mxu0 0.0
        %453 = vmatpush.msra.mxu0 0.0
        %454 = vmatpush.msra.mxu0 0.0
        %455 = vmatpush.msra.mxu0 0.0
        %456 = vmatpush.msra.mxu0 0.0
        %457 = vmatpush.msra.mxu0 0.0
        %458 = vmatpush.msra.mxu0 0.0
        %459 = vmatpush.msra.mxu0 %v402
        %460 = vmatpush.msra.mxu0 %v398
        %461 = vmatpush.msra.mxu0 %v394
        %462 = vmatpush.msra.mxu0 %v390
        %463 = vmatmul.f32.gmra.mxu0 %v436
        %v464 = vpop.f32.mrf.mxu0
        %v465 = vadd.f32 %v417, %v464
        %466 = vmatmul.f32.gmra.mxu0 %v439
        %v467 = vpop.f32.mrf.mxu0
        %v468 = vadd.f32 %v422, %v467
        %469 = vmatmul.f32.gmra.mxu0 %v442
        %v470 = vpop.f32.mrf.mxu0
        %v471 = vadd.f32 %v427, %v470
        %472 = vmatmul.f32.gmra.mxu0 %v445
        %v473 = vpop.f32.mrf.mxu0
        %v474 = vadd.f32 %v432, %v473
        %475 = vdwg.mxu0
        %476 = vmatpush.msra.mxu0 0.0
        %477 = vmatpush.msra.mxu0 0.0
        %478 = vmatpush.msra.mxu0 0.0
        %479 = vmatpush.msra.mxu0 0.0
        %480 = vmatpush.msra.mxu0 0.0
        %481 = vmatpush.msra.mxu0 0.0
        %482 = vmatpush.msra.mxu0 0.0
        %483 = vmatpush.msra.mxu0 0.0
        %484 = vmatpush.msra.mxu0 0.0
        %485 = vmatpush.msra.mxu0 0.0
        %486 = vmatpush.msra.mxu0 0.0
        %487 = vmatpush.msra.mxu0 0.0
        %488 = vmatpush.msra.mxu0 %v403
        %489 = vmatpush.msra.mxu0 %v399
        %490 = vmatpush.msra.mxu0 %v395
        %491 = vmatpush.msra.mxu0 %v391
        %492 = vmatmul.f32.gmra.mxu0 %v436
        %v493 = vpop.f32.mrf.mxu0
        %v494 = vadd.f32 %v417, %v493
        %495 = vmatmul.f32.gmra.mxu0 %v439
        %v496 = vpop.f32.mrf.mxu0
        %v497 = vadd.f32 %v422, %v496
        %498 = vmatmul.f32.gmra.mxu0 %v442
        %v499 = vpop.f32.mrf.mxu0
        %v500 = vadd.f32 %v427, %v499
        %501 = vmatmul.f32.gmra.mxu0 %v445
        %v502 = vpop.f32.mrf.mxu0
        %v503 = vadd.f32 %v432, %v502
        %504 = vdwg.mxu0
        %505 = vmatpush.msra.mxu0 0.0
        %506 = vmatpush.msra.mxu0 0.0
        %507 = vmatpush.msra.mxu0 0.0
        %508 = vmatpush.msra.mxu0 0.0
        %509 = vmatpush.msra.mxu0 0.0
        %510 = vmatpush.msra.mxu0 0.0
        %511 = vmatpush.msra.mxu0 0.0
        %512 = vmatpush.msra.mxu0 0.0
        %513 = vmatpush.msra.mxu0 0.0
        %514 = vmatpush.msra.mxu0 0.0
        %515 = vmatpush.msra.mxu0 0.0
        %516 = vmatpush.msra.mxu0 0.0
        %517 = vmatpush.msra.mxu0 %v404
        %518 = vmatpush.msra.mxu0 %v400
        %519 = vmatpush.msra.mxu0 %v396
        %520 = vmatpush.msra.mxu0 %v392
        %521 = vmatmul.f32.gmra.mxu0 %v436
        %v522 = vpop.f32.mrf.mxu0
        %v523 = vadd.f32 %v417, %v522
        %524 = vmatmul.f32.gmra.mxu0 %v439
        %v525 = vpop.f32.mrf.mxu0
        %v526 = vadd.f32 %v422, %v525
        %527 = vmatmul.f32.gmra.mxu0 %v442
        %v528 = vpop.f32.mrf.mxu0
        %v529 = vadd.f32 %v427, %v528
        %530 = vmatmul.f32.gmra.mxu0 %v445
        %v531 = vpop.f32.mrf.mxu0
        %v532 = vadd.f32 %v432, %v531
        %533 = vdwg.mxu0
        %534 = vmatpush.msra.mxu0 0.0
        %535 = vmatpush.msra.mxu0 0.0
        %536 = vmatpush.msra.mxu0 0.0
        %537 = vmatpush.msra.mxu0 0.0
        %538 = vmatpush.msra.mxu0 0.0
        %539 = vmatpush.msra.mxu0 0.0
        %540 = vmatpush.msra.mxu0 0.0
        %541 = vmatpush.msra.mxu0 0.0
        %542 = vmatpush.msra.mxu0 0.0
        %543 = vmatpush.msra.mxu0 0.0
        %544 = vmatpush.msra.mxu0 0.0
        %545 = vmatpush.msra.mxu0 0.0
        %546 = vmatpush.msra.mxu0 %v405
        %547 = vmatpush.msra.mxu0 %v401
        %548 = vmatpush.msra.mxu0 %v397
        %549 = vmatpush.msra.mxu0 %v393
        %550 = vmatmul.f32.gmra.mxu0 %v436
        %v551 = vpop.f32.mrf.mxu0
        %v552 = vadd.f32 %v417, %v551
        %553 = vmatmul.f32.gmra.mxu0 %v439
        %v554 = vpop.f32.mrf.mxu0
        %v555 = vadd.f32 %v422, %v554
        %556 = vmatmul.f32.gmra.mxu0 %v442
        %v557 = vpop.f32.mrf.mxu0
        %v558 = vadd.f32 %v427, %v557
        %559 = vmatmul.f32.gmra.mxu0 %v445
        %v560 = vpop.f32.mrf.mxu0
        %v561 = vadd.f32 %v432, %v560
        %562 = vdwg.mxu0
        %v563 = vtanh.pop %v465
        %v564 = vtanh.pop %v494
        %v565 = vtanh.pop %v523
        %v566 = vtanh.pop %v552
        %v567 = vtanh.pop %v468
        %v568 = vtanh.pop %v497
        %v569 = vtanh.pop %v526
        %v570 = vtanh.pop %v555
        %v571 = vtanh.pop %v471
        %v572 = vtanh.pop %v500
        %v573 = vtanh.pop %v529
        %v574 = vtanh.pop %v558
        %v575 = vtanh.pop %v474
        %v576 = vtanh.pop %v503
        %v577 = vtanh.pop %v532
        %v578 = vtanh.pop %v561
        %s579 = scalar_lea.vmem %s2, 32
        %v580 = vld [vmem:[%s579] sm:$0xff]
        %v581 = vld [vmem:[%s579 + $0x8] sm:$0xff]
        %v582 = vld [vmem:[%s579 + $0x10] sm:$0xff]
        %v583 = vld [vmem:[%s579 + $0x18] sm:$0xff]
        %s584 = scalar_lea.vmem %s3, 32
        %v585 = vld [vmem:[%s584] sm:$0xff]
        %v586 = vld [vmem:[%s584 + $0x8] sm:$0xff]
        %v587 = vld [vmem:[%s584 + $0x10] sm:$0xff]
        %v588 = vld [vmem:[%s584 + $0x18] sm:$0xff]
        %590 = vset.pattern.permute.xlu0 0
        %591 = vperm.xlu0 %590, %v585
        %v592 = vpop.permute.xlu0 %591
        %595 = vset.pattern.permute.xlu0 0
        %596 = vperm.xlu0 %595, %v586
        %v597 = vpop.permute.xlu0 %596
        %600 = vset.pattern.permute.xlu0 0
        %601 = vperm.xlu0 %600, %v587
        %v602 = vpop.permute.xlu0 %601
        %605 = vset.pattern.permute.xlu0 0
        %606 = vperm.xlu0 %605, %v588
        %v607 = vpop.permute.xlu0 %606
        %v610 = vsel %vm434, %v580, 0
        %v613 = vsel %vm434, %v581, 0
        %v616 = vsel %vm434, %v582, 0
        %v619 = vsel %vm434, %v583, 0
        %621 = vmatpush.msra.mxu0 0.0
        %622 = vmatpush.msra.mxu0 0.0
        %623 = vmatpush.msra.mxu0 0.0
        %624 = vmatpush.msra.mxu0 0.0
        %625 = vmatpush.msra.mxu0 0.0
        %626 = vmatpush.msra.mxu0 0.0
        %627 = vmatpush.msra.mxu0 0.0
        %628 = vmatpush.msra.mxu0 0.0
        %629 = vmatpush.msra.mxu0 0.0
        %630 = vmatpush.msra.mxu0 0.0
        %631 = vmatpush.msra.mxu0 0.0
        %632 = vmatpush.msra.mxu0 0.0
        %633 = vmatpush.msra.mxu0 %v575
        %634 = vmatpush.msra.mxu0 %v571
        %635 = vmatpush.msra.mxu0 %v567
        %636 = vmatpush.msra.mxu0 %v563
        %637 = vmatmul.f32.gmra.mxu0 %v610
        %v638 = vpop.f32.mrf.mxu0
        %v639 = vadd.f32 %v592, %v638
        %640 = vmatmul.f32.gmra.mxu0 %v613
        %v641 = vpop.f32.mrf.mxu0
        %v642 = vadd.f32 %v597, %v641
        %643 = vmatmul.f32.gmra.mxu0 %v616
        %v644 = vpop.f32.mrf.mxu0
        %v645 = vadd.f32 %v602, %v644
        %646 = vmatmul.f32.gmra.mxu0 %v619
        %v647 = vpop.f32.mrf.mxu0
        %v648 = vadd.f32 %v607, %v647
        %649 = vdwg.mxu0
        %650 = vmatpush.msra.mxu0 0.0
        %651 = vmatpush.msra.mxu0 0.0
        %652 = vmatpush.msra.mxu0 0.0
        %653 = vmatpush.msra.mxu0 0.0
        %654 = vmatpush.msra.mxu0 0.0
        %655 = vmatpush.msra.mxu0 0.0
        %656 = vmatpush.msra.mxu0 0.0
        %657 = vmatpush.msra.mxu0 0.0
        %658 = vmatpush.msra.mxu0 0.0
        %659 = vmatpush.msra.mxu0 0.0
        %660 = vmatpush.msra.mxu0 0.0
        %661 = vmatpush.msra.mxu0 0.0
        %662 = vmatpush.msra.mxu0 %v576
        %663 = vmatpush.msra.mxu0 %v572
        %664 = vmatpush.msra.mxu0 %v568
        %665 = vmatpush.msra.mxu0 %v564
        %666 = vmatmul.f32.gmra.mxu0 %v610
        %v667 = vpop.f32.mrf.mxu0
        %v668 = vadd.f32 %v592, %v667
        %669 = vmatmul.f32.gmra.mxu0 %v613
        %v670 = vpop.f32.mrf.mxu0
        %v671 = vadd.f32 %v597, %v670
        %672 = vmatmul.f32.gmra.mxu0 %v616
        %v673 = vpop.f32.mrf.mxu0
        %v674 = vadd.f32 %v602, %v673
        %675 = vmatmul.f32.gmra.mxu0 %v619
        %v676 = vpop.f32.mrf.mxu0
        %v677 = vadd.f32 %v607, %v676
        %678 = vdwg.mxu0
        %679 = vmatpush.msra.mxu0 0.0
        %680 = vmatpush.msra.mxu0 0.0
        %681 = vmatpush.msra.mxu0 0.0
        %682 = vmatpush.msra.mxu0 0.0
        %683 = vmatpush.msra.mxu0 0.0
        %684 = vmatpush.msra.mxu0 0.0
        %685 = vmatpush.msra.mxu0 0.0
        %686 = vmatpush.msra.mxu0 0.0
        %687 = vmatpush.msra.mxu0 0.0
        %688 = vmatpush.msra.mxu0 0.0
        %689 = vmatpush.msra.mxu0 0.0
        %690 = vmatpush.msra.mxu0 0.0
        %691 = vmatpush.msra.mxu0 %v577
        %692 = vmatpush.msra.mxu0 %v573
        %693 = vmatpush.msra.mxu0 %v569
        %694 = vmatpush.msra.mxu0 %v565
        %695 = vmatmul.f32.gmra.mxu0 %v610
        %v696 = vpop.f32.mrf.mxu0
        %v697 = vadd.f32 %v592, %v696
        %698 = vmatmul.f32.gmra.mxu0 %v613
        %v699 = vpop.f32.mrf.mxu0
        %v700 = vadd.f32 %v597, %v699
        %701 = vmatmul.f32.gmra.mxu0 %v616
        %v702 = vpop.f32.mrf.mxu0
        %v703 = vadd.f32 %v602, %v702
        %704 = vmatmul.f32.gmra.mxu0 %v619
        %v705 = vpop.f32.mrf.mxu0
        %v706 = vadd.f32 %v607, %v705
        %707 = vdwg.mxu0
        %708 = vmatpush.msra.mxu0 0.0
        %709 = vmatpush.msra.mxu0 0.0
        %710 = vmatpush.msra.mxu0 0.0
        %711 = vmatpush.msra.mxu0 0.0
        %712 = vmatpush.msra.mxu0 0.0
        %713 = vmatpush.msra.mxu0 0.0
        %714 = vmatpush.msra.mxu0 0.0
        %715 = vmatpush.msra.mxu0 0.0
        %716 = vmatpush.msra.mxu0 0.0
        %717 = vmatpush.msra.mxu0 0.0
        %718 = vmatpush.msra.mxu0 0.0
        %719 = vmatpush.msra.mxu0 0.0
        %720 = vmatpush.msra.mxu0 %v578
        %721 = vmatpush.msra.mxu0 %v574
        %722 = vmatpush.msra.mxu0 %v570
        %723 = vmatpush.msra.mxu0 %v566
        %724 = vmatmul.f32.gmra.mxu0 %v610
        %v725 = vpop.f32.mrf.mxu0
        %v726 = vadd.f32 %v592, %v725
        %727 = vmatmul.f32.gmra.mxu0 %v613
        %v728 = vpop.f32.mrf.mxu0
        %v729 = vadd.f32 %v597, %v728
        %730 = vmatmul.f32.gmra.mxu0 %v616
        %v731 = vpop.f32.mrf.mxu0
        %v732 = vadd.f32 %v602, %v731
        %733 = vmatmul.f32.gmra.mxu0 %v619
        %v734 = vpop.f32.mrf.mxu0
        %v735 = vadd.f32 %v607, %v734
        %736 = vdwg.mxu0
        %v737 = vtanh.pop %v639
        %v738 = vtanh.pop %v668
        %v739 = vtanh.pop %v697
        %v740 = vtanh.pop %v726
        %v741 = vtanh.pop %v642
        %v742 = vtanh.pop %v671
        %v743 = vtanh.pop %v700
        %v744 = vtanh.pop %v729
        %v745 = vtanh.pop %v645
        %v746 = vtanh.pop %v674
        %v747 = vtanh.pop %v703
        %v748 = vtanh.pop %v732
        %v749 = vtanh.pop %v648
        %v750 = vtanh.pop %v677
        %v751 = vtanh.pop %v706
        %v752 = vtanh.pop %v735
        %v753 = vld [vmem:[%s4] sm:$0x1]
        %755 = vset.pattern.permute.xlu0 32
        %756 = vperm.xlu0 %755, %v753
        %v757 = vpop.permute.xlu0 %756
        %v759 = vperm.slane %v757, 0
        %v760 = vsel %vm434, %v753, 0
        %762 = vmatpush.msra.mxu0 0.0
        %763 = vmatpush.msra.mxu0 0.0
        %764 = vmatpush.msra.mxu0 0.0
        %765 = vmatpush.msra.mxu0 0.0
        %766 = vmatpush.msra.mxu0 0.0
        %767 = vmatpush.msra.mxu0 0.0
        %768 = vmatpush.msra.mxu0 0.0
        %769 = vmatpush.msra.mxu0 0.0
        %770 = vmatpush.msra.mxu0 0.0
        %771 = vmatpush.msra.mxu0 0.0
        %772 = vmatpush.msra.mxu0 0.0
        %773 = vmatpush.msra.mxu0 0.0
        %774 = vmatpush.msra.mxu0 %v749
        %775 = vmatpush.msra.mxu0 %v745
        %776 = vmatpush.msra.mxu0 %v741
        %777 = vmatpush.msra.mxu0 %v737
        %778 = vmatmul.f32.gmra.mxu0 %v760
        %v779 = vpop.f32.mrf.mxu0
        %v780 = vadd.f32 %v759, %v779
        %781 = vdwg.mxu0
        %782 = vmatpush.msra.mxu0 0.0
        %783 = vmatpush.msra.mxu0 0.0
        %784 = vmatpush.msra.mxu0 0.0
        %785 = vmatpush.msra.mxu0 0.0
        %786 = vmatpush.msra.mxu0 0.0
        %787 = vmatpush.msra.mxu0 0.0
        %788 = vmatpush.msra.mxu0 0.0
        %789 = vmatpush.msra.mxu0 0.0
        %790 = vmatpush.msra.mxu0 0.0
        %791 = vmatpush.msra.mxu0 0.0
        %792 = vmatpush.msra.mxu0 0.0
        %793 = vmatpush.msra.mxu0 0.0
        %794 = vmatpush.msra.mxu0 %v750
        %795 = vmatpush.msra.mxu0 %v746
        %796 = vmatpush.msra.mxu0 %v742
        %797 = vmatpush.msra.mxu0 %v738
        %798 = vmatmul.f32.gmra.mxu0 %v760
        %v799 = vpop.f32.mrf.mxu0
        %v800 = vadd.f32 %v759, %v799
        %801 = vdwg.mxu0
        %802 = vmatpush.msra.mxu0 0.0
        %803 = vmatpush.msra.mxu0 0.0
        %804 = vmatpush.msra.mxu0 0.0
        %805 = vmatpush.msra.mxu0 0.0
        %806 = vmatpush.msra.mxu0 0.0
        %807 = vmatpush.msra.mxu0 0.0
        %808 = vmatpush.msra.mxu0 0.0
        %809 = vmatpush.msra.mxu0 0.0
        %810 = vmatpush.msra.mxu0 0.0
        %811 = vmatpush.msra.mxu0 0.0
        %812 = vmatpush.msra.mxu0 0.0
        %813 = vmatpush.msra.mxu0 0.0
        %814 = vmatpush.msra.mxu0 %v751
        %815 = vmatpush.msra.mxu0 %v747
        %816 = vmatpush.msra.mxu0 %v743
        %817 = vmatpush.msra.mxu0 %v739
        %818 = vmatmul.f32.gmra.mxu0 %v760
        %v819 = vpop.f32.mrf.mxu0
        %v820 = vadd.f32 %v759, %v819
        %821 = vdwg.mxu0
        %822 = vmatpush.msra.mxu0 0.0
        %823 = vmatpush.msra.mxu0 0.0
        %824 = vmatpush.msra.mxu0 0.0
        %825 = vmatpush.msra.mxu0 0.0
        %826 = vmatpush.msra.mxu0 0.0
        %827 = vmatpush.msra.mxu0 0.0
        %828 = vmatpush.msra.mxu0 0.0
        %829 = vmatpush.msra.mxu0 0.0
        %830 = vmatpush.msra.mxu0 0.0
        %831 = vmatpush.msra.mxu0 0.0
        %832 = vmatpush.msra.mxu0 0.0
        %833 = vmatpush.msra.mxu0 0.0
        %834 = vmatpush.msra.mxu0 %v752
        %835 = vmatpush.msra.mxu0 %v748
        %836 = vmatpush.msra.mxu0 %v744
        %837 = vmatpush.msra.mxu0 %v740
        %838 = vmatmul.f32.gmra.mxu0 %v760
        %v839 = vpop.f32.mrf.mxu0
        %v840 = vadd.f32 %v759, %v839
        %841 = vdwg.mxu0
        %v846 = vrot.slane %v800, 7
        %v847 = vrot.slane %v820, 6
        %v848 = vrot.slane %v840, 5
        %vm849 = vcmask 1040384
        %v850 = vsel %vm849, %v780, %v846
        %vm851 = vcmask 1042434
        %v852 = vsel %vm851, %v847, %v848
        %vm853 = vcmask 1041408
        %v854 = vsel %vm853, %v850, %v852
        %v856 = vlaneseq
        %vm857 = vcmp.ge.s32.totalorder %v856, 0
        %vm858 = vcmp.lt.s32.totalorder %v856, 512
        %vm859 = vmand %vm857, %vm858
        %860 = vst.msk [vmem:[%s218] sm:$0xf] %vm859, %v854
        %s861 = sand.u32 %s137, 1
        %s862 = scalar_lea.sflag [#allocation3], %s861
        %s863 = sand.u32 %s137, 1
        %s864 = smul.addr %s863, 4
        %s865 = scalar_lea.vmem [#allocation2], %s864
        // Predicated region
        $region41: #{tpu_custom_call.1} parent=39 // pred_check
          %p866 = pneg %p147
        $region42: #{tpu_custom_call.1} parent=39 // pred_check_branch
          %868 = sbr.rel (%p866) target = $region44
        $region43: #{tpu_custom_call.1} parent=39 // pred_region
          %s869 = smul.u32 4, %s19
          %871 = vsyncadd %s862, 0
          %s872 = scalar_lea.hbm %s5, %s869
          %s874 = sshll.u32 %s865, 4
          %s875 = int_to_ptr.vmem [resolvable:$true] %s874
          %s876 = sshll.u32 %s872, 4
          %s877 = int_to_ptr.hbm [resolvable:$true] %s876
          %879 = dma.vmem_to_hbm [thread:$0]  %s875, 64, %s877, %s862
        $region44: #{tpu_custom_call.1} parent=39 // pred_fallthru
          _
      $region40: #{tpu_custom_call.1} parent=5 // pred_fallthru
        _
      %p880 = scmp.le.s32.totalorder 2, %s14
      // Predicated region
      $region45: #{tpu_custom_call.1} parent=5 // pred_check
        %p881 = pneg %p880
      $region46: #{tpu_custom_call.1} parent=5 // pred_check_branch
        %883 = sbr.rel (%p881) target = $region48
      $region47: #{tpu_custom_call.1} parent=5 // pred_region
        %s884 = ssub.s32 %s14, 2
        // Predicated region
        $region49: #{tpu_custom_call.1} parent=47 // pred_check
          %p885 = pneg %p153
        $region50: #{tpu_custom_call.1} parent=47 // pred_check_branch
          %887 = sbr.rel (%p885) target = $region52
        $region51: #{tpu_custom_call.1} parent=47 // pred_region
          %s888 = sand.u32 %s138, 1
          %s889 = scalar_lea.sflag [#allocation3], %s888
          %s890 = sand.u32 %s138, 1
          %s891 = smul.addr %s890, 4
          %s892 = scalar_lea.vmem [#allocation2], %s891
          %894 = dma.done %s889, 64
        $region52: #{tpu_custom_call.1} parent=47 // pred_fallthru
          _
      $region48: #{tpu_custom_call.1} parent=5 // pred_fallthru
        _
    $region6: #{tpu_custom_call.1} parent=1 // loop_footer
      %s18 = sadd.s32 1, %s14
    $region7: #{tpu_custom_call.1} parent=1 // loop_footer_branch
      %13 = sbr.rel target = $region3
    $region8: #{tpu_custom_call.1} parent=1 // loop_exit
      _
    %895 = vsyncpa [#allocation3], 1
    %s896 = scalar_lea.sflag [#allocation3], 1
    %897 = vsyncpa %s896, 1

</llo_original>
